<compile_context>
chip_gen: v7x
topology: tpu7x:2x2x1
jax: 0.10.0
libtpu: 0.0.40
codegen_flags: <defaults>
</compile_context>

<pallas_src>
import functools
import math

import jax
import jax.numpy as jnp
from jax.experimental import pallas as pl
from jax.experimental.pallas import tpu as pltpu


def _layernorm_kernel(x_ref, g_ref, b_ref, o_ref, *, features, eps):
    x = x_ref[...].astype(jnp.float32)                       # (tile_rows, F)
    mean = jnp.mean(x, axis=-1, keepdims=True)                # (tile_rows, 1)
    d = x - mean
    # torch.std default is the unbiased estimator (ddof=1).
    var = jnp.sum(d * d, axis=-1, keepdims=True) * jnp.float32(1.0 / (features - 1))
    denom = jnp.sqrt(var) + jnp.float32(eps)                  # eps added to std
    # EUP approximate reciprocal (free slot) + one Newton step on the tiny
    # (tile_rows, 1) tensor to recover full f32 accuracy.
    inv = pl.reciprocal(denom, approx=True)
    inv = inv * (jnp.float32(2.0) - denom * inv)
    g = g_ref[...].astype(jnp.float32)                        # (1, F)
    b = b_ref[...].astype(jnp.float32)                        # (1, F)
    y = d * inv * g + b
    o_ref[...] = y.astype(o_ref.dtype)


def _vmem_capacity_bytes():
    """Physical VMEM per TensorCore; conservative fallback if query fails."""
    try:
        info = pltpu.get_tpu_info()
        cap = getattr(info, "vmem_capacity_bytes", None)
        if cap:
            return int(cap)
    except Exception:
        pass
    return 64 * 1024 * 1024  # v7x-sized fallback (smallest of the targets)


def _pick_tiling(rows, features, dtype):
    """Pick tile_rows + vmem_limit so double-buffered in/out blocks fit VMEM."""
    dtype_bytes = jnp.dtype(dtype).itemsize
    # Sublane packing: f32 -> 8, bf16 -> 16, int8/fp8 -> 32.
    row_mult = max(8, 32 // max(1, dtype_bytes))

    vmem_cap = _vmem_capacity_bytes()
    # Raise the scoped limit above the (16/32 MiB) defaults, but leave headroom
    # below physical capacity (64 MiB on v7x, 128 MiB on v5e/v6e).
    vmem_limit = min(int(vmem_cap * 0.75), 100 * 1024 * 1024)
    # Buffers: 2 pipeline slots x (input block + output block).
    budget = vmem_limit // 2
    bytes_per_row = 4 * features * dtype_bytes
    tile_rows = budget // max(1, bytes_per_row)
    tile_rows = max(row_mult, min(int(tile_rows), 1024))

    # Don't make the block larger than the (rounded-up) problem.
    rows_ceil = ((rows + row_mult - 1) // row_mult) * row_mult
    tile_rows = min(tile_rows, rows_ceil)
    tile_rows = max(row_mult, (tile_rows // row_mult) * row_mult)
    return tile_rows, vmem_limit


def layer_norm(x, a_2, b_2, eps=1e-6, tile_rows=None):
    """x: (..., features). a_2 / b_2: (features,)."""
    orig_shape = x.shape
    features = orig_shape[-1]
    assert features > 1, "unbiased std (ddof=1) needs features > 1"

    rows = int(math.prod(orig_shape[:-1])) if len(orig_shape) > 1 else 1
    x2 = x.reshape(rows, features)
    g = a_2.reshape(1, features)
    b = b_2.reshape(1, features)

    auto_tile, vmem_limit = _pick_tiling(rows, features, x.dtype)
    if tile_rows is None:
        tile_rows = auto_tile

    grid = (pl.cdiv(rows, tile_rows),)  # partial tail block handled by Pallas
    kernel = functools.partial(_layernorm_kernel, features=features, eps=eps)

    out = pl.pallas_call(
        kernel,
        out_shape=jax.ShapeDtypeStruct((rows, features), x.dtype),
        grid_spec=pltpu.PrefetchScalarGridSpec(
            num_scalar_prefetch=0,
            grid=grid,
            in_specs=[
                pl.BlockSpec((tile_rows, features), lambda i: (i, 0)),
                pl.BlockSpec((1, features), lambda i: (0, 0)),
                pl.BlockSpec((1, features), lambda i: (0, 0)),
            ],
            out_specs=pl.BlockSpec((tile_rows, features), lambda i: (i, 0)),
        ),
        compiler_params=pltpu.CompilerParams(
            dimension_semantics=("parallel",),
            vmem_limit_bytes=vmem_limit,
        ),
    )(x2, g, b)

    return out.reshape(orig_shape)


def _reference(x, a_2, b_2, eps):
    mean = jnp.mean(x, axis=-1, keepdims=True)
    features = x.shape[-1]
    std = jnp.sqrt(jnp.sum((x - mean) ** 2, axis=-1, keepdims=True) / (features - 1))
    return a_2 * (x - mean) / (std + eps) + b_2


if __name__ == "__main__":
    key = jax.random.PRNGKey(0)
    batch, seq, hidden = 2, 8, 32

    x = jax.random.normal(key, (batch, seq, hidden), dtype=jnp.float32)

    # nn.Parameter(torch.ones(features)) / torch.zeros(features)
    a_2 = jnp.ones((hidden,), dtype=jnp.float32)
    b_2 = jnp.zeros((hidden,), dtype=jnp.float32)

    out = layer_norm(x, a_2, b_2, eps=1e-6)
    out = jax.block_until_ready(out)
    ref = _reference(x, a_2, b_2, 1e-6)
    assert jnp.allclose(out, ref, atol=1e-5, rtol=1e-5), "mismatch vs reference"

    # Also exercise a non-tile-aligned row count (partial tail block, no pad).
    x2 = jax.random.normal(jax.random.PRNGKey(1), (3, 5, hidden), dtype=jnp.float32)
    out2 = jax.block_until_ready(layer_norm(x2, a_2, b_2, eps=1e-6))
    ref2 = _reference(x2, a_2, b_2, 1e-6)
    assert jnp.allclose(out2, ref2, atol=1e-5, rtol=1e-5), "mismatch (ragged rows)"

    print("KERNEL_OK")
</pallas_src>

<mosaic_0001>
module attributes {stable_mosaic.version = 11 : i64} {
  func.func @_layernorm_kernel(%arg0: i32, %arg1: memref<16x32xf32, #tpu.memory_space<vmem>>, %arg2: memref<1x32xf32, #tpu.memory_space<vmem>>, %arg3: memref<1x32xf32, #tpu.memory_space<vmem>>, %arg4: memref<16x32xf32, #tpu.memory_space<vmem>>) attributes {dimension_semantics = [#tpu.dimension_semantics<parallel>], iteration_bounds = array<i64: 1>, scalar_prefetch = 0 : i64, scratch_operands = 0 : i64, tpu.core_type = #tpu.core_type<tc>, window_params = [{transform_indices = @transform_0, window_bounds = array<i64: 16, 32>}, {pipeline_mode = #tpu.pipeline_mode<synchronous>, transform_indices = @transform_1, window_bounds = array<i64: 1, 32>}, {pipeline_mode = #tpu.pipeline_mode<synchronous>, transform_indices = @transform_2, window_bounds = array<i64: 1, 32>}, {transform_indices = @transform_3, window_bounds = array<i64: 16, 32>}]} {
    %c0 = arith.constant 0 : index
    %c0_0 = arith.constant 0 : index
    %0 = vector.load %arg1[%c0, %c0_0] : memref<16x32xf32, #tpu.memory_space<vmem>>, vector<16x32xf32>
    %cst = arith.constant dense<0.000000e+00> : vector<16xf32>
    %1 = vector.multi_reduction <add>, %0, %cst [1] : vector<16x32xf32> to vector<16xf32>
    %2 = vector.shape_cast %1 : vector<16xf32> to vector<16x1xf32>
    %cst_1 = arith.constant 3.200000e+01 : f32
    %3 = vector.broadcast %cst_1 : f32 to vector<16x1xf32>
    %4 = arith.divf %2, %3 : vector<16x1xf32>
    %5 = vector.broadcast %4 : vector<16x1xf32> to vector<16x32xf32>
    %6 = arith.subf %0, %5 : vector<16x32xf32>
    %7 = arith.mulf %6, %6 : vector<16x32xf32>
    %cst_2 = arith.constant dense<0.000000e+00> : vector<16xf32>
    %8 = vector.multi_reduction <add>, %7, %cst_2 [1] : vector<16x32xf32> to vector<16xf32>
    %9 = vector.shape_cast %8 : vector<16xf32> to vector<16x1xf32>
    %cst_3 = arith.constant 0.0322580636 : f32
    %10 = vector.broadcast %cst_3 : f32 to vector<16x1xf32>
    %11 = arith.mulf %9, %10 : vector<16x1xf32>
    %12 = math.sqrt %11 : vector<16x1xf32>
    %cst_4 = arith.constant 9.99999997E-7 : f32
    %13 = vector.broadcast %cst_4 : f32 to vector<16x1xf32>
    %14 = arith.addf %12, %13 : vector<16x1xf32>
    %15 = tpu.reciprocal %14 {approx = true} : vector<16x1xf32> -> vector<16x1xf32>
    %16 = arith.mulf %14, %15 : vector<16x1xf32>
    %cst_5 = arith.constant 2.000000e+00 : f32
    %17 = vector.broadcast %cst_5 : f32 to vector<16x1xf32>
    %18 = arith.subf %17, %16 : vector<16x1xf32>
    %19 = arith.mulf %15, %18 : vector<16x1xf32>
    %c0_6 = arith.constant 0 : index
    %c0_7 = arith.constant 0 : index
    %20 = vector.load %arg2[%c0_6, %c0_7] : memref<1x32xf32, #tpu.memory_space<vmem>>, vector<1x32xf32>
    %c0_8 = arith.constant 0 : index
    %c0_9 = arith.constant 0 : index
    %21 = vector.load %arg3[%c0_8, %c0_9] : memref<1x32xf32, #tpu.memory_space<vmem>>, vector<1x32xf32>
    %22 = vector.broadcast %19 : vector<16x1xf32> to vector<16x32xf32>
    %23 = arith.mulf %6, %22 : vector<16x32xf32>
    %24 = vector.broadcast %20 : vector<1x32xf32> to vector<16x32xf32>
    %25 = arith.mulf %23, %24 : vector<16x32xf32>
    %26 = vector.broadcast %21 : vector<1x32xf32> to vector<16x32xf32>
    %27 = arith.addf %25, %26 : vector<16x32xf32>
    %c0_10 = arith.constant 0 : index
    %c0_11 = arith.constant 0 : index
    %28 = vector.load %arg4[%c0_10, %c0_11] : memref<16x32xf32, #tpu.memory_space<vmem>>, vector<16x32xf32>
    tpu.vector_store %arg4[%c0_10, %c0_11], %27 {strides = array<i32>} : memref<16x32xf32, #tpu.memory_space<vmem>>, vector<16x32xf32>,
    return
  }
  func.func @transform_0(%arg0: i32) -> (i32, i32) {
    %c0_i32 = arith.constant 0 : i32
    %c0_i32_0 = arith.constant 0 : i32
    return %arg0, %c0_i32 : i32, i32
  }
  func.func @transform_1(%arg0: i32) -> (i32, i32) {
    %c0_i32 = arith.constant 0 : i32
    %c0_i32_0 = arith.constant 0 : i32
    %c0_i32_1 = arith.constant 0 : i32
    return %c0_i32, %c0_i32_0 : i32, i32
  }
  func.func @transform_2(%arg0: i32) -> (i32, i32) {
    %c0_i32 = arith.constant 0 : i32
    %c0_i32_0 = arith.constant 0 : i32
    %c0_i32_1 = arith.constant 0 : i32
    return %c0_i32, %c0_i32_0 : i32, i32
  }
  func.func @transform_3(%arg0: i32) -> (i32, i32) {
    %c0_i32 = arith.constant 0 : i32
    %c0_i32_0 = arith.constant 0 : i32
    return %arg0, %c0_i32 : i32, i32
  }
}

</mosaic_0001>

<llo_original>
// kernel: tpu_custom_call.1
$region0: #{tpu_custom_call.1}
  #allocation0 [shape = 'u32[]', space=smem, size = 0x4, offset = 0x4, fixed_abs, tag = 'smem constant byte address 0x4 - core index']
  #allocation1 [shape = 'u32[144,128]{1,0:T(1,128)}', space=vmem, size = 0x12000, scoped, tag = 'internal scratch']
  %s0 = inlined_call_operand.hbm [shape: f32[16,32], index: 0, kind: input, shape index: {}]
  %s1 = inlined_call_operand.vmem [shape: f32[1,32], index: 1, kind: input, shape index: {}]
  %s2 = inlined_call_operand.vmem [shape: f32[1,32], index: 2, kind: input, shape index: {}]
  %s3 = inlined_call_operand.hbm [shape: f32[16,32], index: 3, kind: output, shape index: {}]
  %s4 = sld [smem:[#allocation0]]
  $region26: #{tpu_custom_call.1} parent=0
    _
  %s6 = ssub.s32 1, %s4
  %s7 = scalar_select 0, %s6, %s4
  $region1: #{tpu_custom_call.1} parent=0
    #allocation2 [shape = 'u8[8192]{0}', space=vmem, size = 0x2000, scoped, tag = 'input window, operand 0, single buffered']
    #allocation3 [shape = 's32[1]{0}', space=sflag, size = 0x4, scoped, tag = 'scoped memory for tpu_custom_call.1']
    #allocation4 [shape = 's32[1]{0}', space=sflag, size = 0x4, scoped, tag = 'scoped memory for tpu_custom_call.1']
    #allocation5 [shape = 'u8[8192]{0}', space=vmem, size = 0x2000, scoped, tag = 'output window, operand 0, single buffered']
    %8 = vsyncpa [#allocation3], 0
    %9 = vsyncpa [#allocation4], 0
    // Predicated region
    $region2: #{tpu_custom_call.1} parent=1 // pred_check
      _
    $region3: #{tpu_custom_call.1} parent=1 // pred_check_branch
      %11 = sbr.rel (0) target = $region5
    $region4: #{tpu_custom_call.1} parent=1 // pred_region
      %s13 = ssub.s32 256, 256
      %14 = vsyncadd [#allocation3], %s13
      %s15 = sshll.u32 [#allocation2], 4
      %s16 = int_to_ptr.vmem [resolvable:$true] %s15
      %21 = dma.hbm_to_vmem [thread:$0]  %s0, 256, %s16, [#allocation3], 128, 128, 8
    $region5: #{tpu_custom_call.1} parent=1 // pred_fallthru
      _
    // Predicated region
    $region6: #{tpu_custom_call.1} parent=1 // pred_check
      _
    $region7: #{tpu_custom_call.1} parent=1 // pred_check_branch
      %23 = sbr.rel (0) target = $region9
    $region8: #{tpu_custom_call.1} parent=1 // pred_region
      _
    $region9: #{tpu_custom_call.1} parent=1 // pred_fallthru
      _
    // Predicated region
    $region10: #{tpu_custom_call.1} parent=1 // pred_check
      _
    $region11: #{tpu_custom_call.1} parent=1 // pred_check_branch
      %25 = sbr.rel (0) target = $region13
    $region12: #{tpu_custom_call.1} parent=1 // pred_region
      _
    $region13: #{tpu_custom_call.1} parent=1 // pred_fallthru
      _
    // Predicated region
    $region14: #{tpu_custom_call.1} parent=1 // pred_check
      _
    $region15: #{tpu_custom_call.1} parent=1 // pred_check_branch
      %27 = sbr.rel (0) target = $region17
    $region16: #{tpu_custom_call.1} parent=1 // pred_region
      %28 = dma.done [#allocation3], 256
    $region17: #{tpu_custom_call.1} parent=1 // pred_fallthru
      _
    %v29 = vld [vmem:[#allocation2] sm:$0xff]
    %v30 = vld [vmem:[#allocation2 + $0x8] sm:$0xff]
    %vm31 = vcmask 261120
    %v32 = vsel %vm31, %v29, 0.0
    %33 = vadd.xlane.f32.xlu0 %v32
    %v34 = vpop.xlane.xlu0 %33
    %v35 = vsel %vm31, %v30, 0.0
    %36 = vadd.xlane.f32.xlu0 %v35
    %v37 = vpop.xlane.xlu0 %36
    %v38 = vrcp.pop 32.0
    %v39 = vmul.f32 %v34, %v38
    %v40 = vmul.f32 %v37, %v38
    %v41 = vsub.f32 %v29, %v39
    %v42 = vsub.f32 %v30, %v40
    %v43 = vmul.f32 %v41, %v41
    %v44 = vmul.f32 %v42, %v42
    %v45 = vsel %vm31, %v43, 0.0
    %46 = vadd.xlane.f32.xlu0 %v45
    %v47 = vpop.xlane.xlu0 %46
    %v48 = vsel %vm31, %v44, 0.0
    %49 = vadd.xlane.f32.xlu0 %v48
    %v50 = vpop.xlane.xlu0 %49
    %v51 = vmul.f32 %v47, 0.032258064
    %v52 = vmul.f32 %v50, 0.032258064
    %v53 = vrsqrt.pop %v51
    %v54 = vmul.f32 %v51, %v53
    %vm55 = vcmp.eq.f32.partialorder %v51, inf
    %v56 = vsel %vm55, %v51, %v54
    %vm57 = vcmp.eq.f32.partialorder %v51, 0.0
    %v58 = vand.u32 %v51, 2147483648
    %v59 = vsel %vm57, %v58, %v56
    %v60 = vrsqrt.pop %v52
    %v61 = vmul.f32 %v52, %v60
    %vm62 = vcmp.eq.f32.partialorder %v52, inf
    %v63 = vsel %vm62, %v52, %v61
    %vm64 = vcmp.eq.f32.partialorder %v52, 0.0
    %v65 = vand.u32 %v52, 2147483648
    %v66 = vsel %vm64, %v65, %v63
    %v67 = vadd.f32 %v59, 1e-06
    %v68 = vadd.f32 %v66, 1e-06
    %v69 = vrcp.pop %v67
    %v70 = vrcp.pop %v68
    %v71 = vmul.f32 %v67, %v69
    %v72 = vmul.f32 %v68, %v70
    %v73 = vsub.f32 2.0, %v71
    %v74 = vsub.f32 2.0, %v72
    %v75 = vmul.f32 %v69, %v73
    %v76 = vmul.f32 %v70, %v74
    %v77 = vld [vmem:[%s1] sm:$0x1]
    %v78 = vld [vmem:[%s2] sm:$0x1]
    %v79 = vmul.f32 %v41, %v75
    %v80 = vmul.f32 %v42, %v76
    %v82 = vlaneseq
    %v83 = vshrl.u32 %v82, 7
    %v84 = vsub.s32 0, %v83
    %v85 = vrot.slane %v77, %v84
    %v87 = vmul.f32 %v79, %v85
    %v88 = vmul.f32 %v80, %v85
    %v90 = vlaneseq
    %v91 = vshrl.u32 %v90, 7
    %v92 = vsub.s32 0, %v91
    %v93 = vrot.slane %v78, %v92
    %v95 = vadd.f32 %v87, %v93
    %v96 = vadd.f32 %v88, %v93
    %97 = vst.msk [vmem:[#allocation5] sm:$0xff] %vm31, %v95
    %98 = vst.msk [vmem:[#allocation5 + $0x8] sm:$0xff] %vm31, %v96
    // Predicated region
    $region18: #{tpu_custom_call.1} parent=1 // pred_check
      _
    $region19: #{tpu_custom_call.1} parent=1 // pred_check_branch
      %100 = sbr.rel (0) target = $region21
    $region20: #{tpu_custom_call.1} parent=1 // pred_region
      %s102 = ssub.s32 256, 256
      %103 = vsyncadd [#allocation4], %s102
      %s104 = sshll.u32 [#allocation5], 4
      %s105 = int_to_ptr.vmem [resolvable:$true] %s104
      %110 = dma.vmem_to_hbm [thread:$0]  %s105, 256, %s3, [#allocation4], 128, 128, 8
    $region21: #{tpu_custom_call.1} parent=1 // pred_fallthru
      _
    // Predicated region
    $region22: #{tpu_custom_call.1} parent=1 // pred_check
      _
    $region23: #{tpu_custom_call.1} parent=1 // pred_check_branch
      %112 = sbr.rel (0) target = $region25
    $region24: #{tpu_custom_call.1} parent=1 // pred_region
      %113 = dma.done [#allocation4], 256
    $region25: #{tpu_custom_call.1} parent=1 // pred_fallthru
      _
    %114 = vsyncpa [#allocation3], 1
    %115 = vsyncpa [#allocation4], 1

</llo_original>
